<compile_context>
chip_gen: v6e
topology: v6e:2x2x1
jax: 0.10.0
libtpu: 0.0.40
codegen_flags: <defaults>
</compile_context>

<pallas_src>
import jax
import jax.numpy as jnp
from jax.experimental import pallas as pl
from jax.experimental.pallas import tpu as pltpu


def _round_up(n, m):
    return n + (-n) % m


def _use_split_w2(hidden_dim):
    # Keep the block-diagonal layer-2 fusion only while 2H fits one MXU tile;
    # for large, 128-aligned H run each critic's layer-2/3 dots separately so
    # we don't spend 2x FLOPs / bytes on a half-zero [2H, 2H] weight.
    return (hidden_dim % 128 == 0) and (2 * hidden_dim > 256)


def _pack_rows(segments):
    """Stack segments along rows at 8-aligned offsets -> (blob, offsets)."""
    rows, offsets, off = [], [], 0
    for s in segments:
        s = jnp.asarray(s, jnp.float32)
        offsets.append(off)
        pad = _round_up(s.shape[0], 8) - s.shape[0]
        rows.append(jnp.pad(s, ((0, pad), (0, 0))))
        off += s.shape[0] + pad
    return jnp.concatenate(rows, axis=0), tuple(offsets)


def pack_double_q_params(q1_params, q2_params, hidden_dim):
    """Fuse the two MLPs' params into two blobs.

    Each qk_params is [w1, b1, w2, b2, w3, b3]; weights stored [in, out],
    biases may be 1-D or [1, n] (PyTorch nn.Linear biases are 1-D).

    Returns (body, body_offsets, head, head_offsets):
      body [Pb, 2H]  : W1 | b1 | W2 | b2
      head [Ph, 128] : W3 | b3   (q1 head in lane 0, q2 head in lane 1)
    """
    H, H2 = hidden_dim, 2 * hidden_dim
    f32 = lambda a: jnp.asarray(a, jnp.float32)
    as2d = lambda a: f32(a).reshape(1, -1)
    w1_1, b1_1, w2_1, b2_1, w3_1, b3_1 = q1_params
    w1_2, b1_2, w2_2, b2_2, w3_2, b3_2 = q2_params

    w1 = jnp.concatenate([f32(w1_1), f32(w1_2)], axis=1)            # [in, 2H]
    b1 = jnp.concatenate([as2d(b1_1), as2d(b1_2)], axis=1)          # [1, 2H]
    if _use_split_w2(hidden_dim):
        w2 = jnp.concatenate([f32(w2_1), f32(w2_2)], axis=1)        # [H, 2H]
    else:
        w2 = jnp.zeros((H2, H2), jnp.float32)
        w2 = w2.at[:H, :H].set(f32(w2_1)).at[H:, H:].set(f32(w2_2))  # block-diag
    b2 = jnp.concatenate([as2d(b2_1), as2d(b2_2)], axis=1)          # [1, 2H]
    body, body_offs = _pack_rows([w1, b1, w2, b2])

    w3 = jnp.zeros((H2, 128), jnp.float32)
    w3 = w3.at[:H, 0:1].set(f32(w3_1).reshape(H, 1))
    w3 = w3.at[H:, 1:2].set(f32(w3_2).reshape(H, 1))
    b3 = jnp.zeros((1, 128), jnp.float32)
    b3 = b3.at[0, 0].set(as2d(b3_1)[0, 0]).at[0, 1].set(as2d(b3_2)[0, 0])
    head, head_offs = _pack_rows([w3, b3])
    return body, body_offs, head, head_offs


def _make_kernel(in_dim, hidden_dim, body_offs, head_offs, split_w2):
    H, H2 = hidden_dim, 2 * hidden_dim
    o_w1, o_b1, o_w2, o_b2 = body_offs
    o_w3, o_b3 = head_offs

    def kernel(x_ref, body_ref, head_ref, o_ref):
        x = x_ref[...]                                  # [tile, in_dim]
        w1 = body_ref[o_w1:o_w1 + in_dim, :]            # [in_dim, 2H]
        b1 = body_ref[o_b1:o_b1 + 1, :]
        b2 = body_ref[o_b2:o_b2 + 1, :]
        b3 = head_ref[o_b3:o_b3 + 1, :]

        # Layer 1 (single dot on the concatenated input).
        h = jnp.maximum(
            jnp.dot(x, w1, preferred_element_type=jnp.float32) + b1, 0.0)

        if split_w2:
            # Large 128-aligned H: per-critic layer-2/3 dots (no zero padding).
            w2p = body_ref[o_w2:o_w2 + H, :]            # [H, 2H] = [w2_1 | w2_2]
            w3a = head_ref[o_w3:o_w3 + H, :]            # [H, 128]  (q1 -> lane 0)
            w3b = head_ref[o_w3 + H:o_w3 + H2, :]       # [H, 128]  (q2 -> lane 1)
            h1 = jnp.maximum(
                jnp.dot(h[:, :H], w2p[:, :H],
                        preferred_element_type=jnp.float32) + b2[:, :H], 0.0)
            h2 = jnp.maximum(
                jnp.dot(h[:, H:], w2p[:, H:],
                        preferred_element_type=jnp.float32) + b2[:, H:], 0.0)
            q = (jnp.dot(h1, w3a, preferred_element_type=jnp.float32)
                 + jnp.dot(h2, w3b, preferred_element_type=jnp.float32) + b3)
        else:
            # Small H: both critics at once via block-diagonal [2H, 2H] weight.
            w2 = body_ref[o_w2:o_w2 + H2, :]
            w3 = head_ref[o_w3:o_w3 + H2, :]            # [2H, 128]
            h = jnp.maximum(
                jnp.dot(h, w2, preferred_element_type=jnp.float32) + b2, 0.0)
            q = jnp.dot(h, w3, preferred_element_type=jnp.float32) + b3

        # Lane-dense store: full [tile, 128] block (unmasked vst); q1 in lane 0,
        # q2 in lane 1, remaining lanes are exact zeros.
        o_ref[...] = q

    return kernel


def _pick_tile(B, batch_tile, in_dim, hidden_dim,
               budget_bytes=12 * 1024 * 1024):
    """Batch tile: as big as a conservative VMEM budget allows, >=2 grid steps."""
    H2p = _round_up(2 * hidden_dim, 128)
    in_p = _round_up(in_dim, 128)
    # Per-row f32 bytes: double-buffered x + out blocks plus live activation
    # temporaries (h, h1/h2, q).
    per_row = 4 * (2 * in_p + 2 * 128 + 2 * H2p + 128)
    cap = max(8, (budget_bytes // per_row) // 8 * 8)
    tile = min(batch_tile, cap)
    tile = min(tile, _round_up((B + 1) // 2, 8))   # keep >= 2 steps (megacore)
    return max(8, tile)


def double_q_critic(obs, action, body, body_offs, head, head_offs, *,
                    hidden_dim, batch_tile=2048):
    """obs: [B, obs_dim], action: [B, action_dim] -> (q1, q2), each [B, 1] f32."""
    assert obs.shape[0] == action.shape[0]
    B = obs.shape[0]
    x = jnp.concatenate(
        [jnp.asarray(obs, jnp.float32), jnp.asarray(action, jnp.float32)],
        axis=-1)
    in_dim = x.shape[1]
    body = jnp.asarray(body, jnp.float32)
    head = jnp.asarray(head, jnp.float32)
    Pb, WB = body.shape
    Ph, WH = head.shape
    H2 = 2 * hidden_dim
    split = _use_split_w2(hidden_dim)
    kernel = _make_kernel(in_dim, hidden_dim, body_offs, head_offs, split)

    # Cap the requested tile so the per-step footprint stays well under v5e's
    # 16 MiB scoped-VMEM default even before the budget-based pick below.
    batch_tile = max(8, min(int(batch_tile), 4096))

    if B <= min(batch_tile, 1024):
        # Small batch: one gridless invocation, everything resident in VMEM.
        vmem = pl.BlockSpec(memory_space=pltpu.MemorySpace.VMEM)
        qq = pl.pallas_call(
            kernel,
            out_shape=jax.ShapeDtypeStruct((B, 128), jnp.float32),
            in_specs=[vmem, vmem, vmem],
            out_specs=vmem,
        )(x, body, head)
    else:
        # Large batch: 1-D batch-parallel grid (megacore shards it on v7x).
        tile = _pick_tile(B, batch_tile, in_dim, hidden_dim)
        grid = pl.cdiv(B, tile)
        Bp = grid * tile
        if Bp != B:
            x = jnp.pad(x, ((0, Bp - B), (0, 0)))   # ragged tail -> zero pad

        flops = 2 * Bp * (in_dim * H2
                          + (hidden_dim * H2 if split else H2 * H2)
                          + H2 * 128)
        bytes_accessed = 4 * (Bp * in_dim + Bp * 128 + body.size + head.size)

        # TODO(synk): for very large hidden_dim the constant-index param blobs
        # could be single-buffered (pl.Buffered(1)) to halve their VMEM.
        qq = pl.pallas_call(
            kernel,
            out_shape=jax.ShapeDtypeStruct((Bp, 128), jnp.float32),
            grid=(grid,),
            in_specs=[
                pl.BlockSpec((tile, in_dim), lambda i: (i, 0)),
                pl.BlockSpec((Pb, WB), lambda i: (0, 0)),
                pl.BlockSpec((Ph, WH), lambda i: (0, 0)),
            ],
            out_specs=pl.BlockSpec((tile, 128), lambda i: (i, 0)),
            compiler_params=pltpu.CompilerParams(
                dimension_semantics=("parallel",),
                vmem_limit_bytes=32 * 1024 * 1024),
            cost_estimate=pl.CostEstimate(
                flops=int(flops), transcendentals=0,
                bytes_accessed=int(bytes_accessed)),
        )(x, body, head)
        qq = qq[:B]

    # q1 lives in lane 0, q2 in lane 1 of the lane-dense output block.
    return qq[:, 0:1], qq[:, 1:2]


def init_mlp_params(key, in_dim, hidden_dim, out_dim):
    """Mimics utils.weight_init: orthogonal weights, zero biases.
    Weights returned as [in, out] (transpose of PyTorch's [out, in])."""
    k1, k2, k3 = jax.random.split(key, 3)
    ortho = jax.nn.initializers.orthogonal()
    w1 = ortho(k1, (hidden_dim, in_dim), jnp.float32).T
    w2 = ortho(k2, (hidden_dim, hidden_dim), jnp.float32).T
    w3 = ortho(k3, (out_dim, hidden_dim), jnp.float32).T
    b1 = jnp.zeros((1, hidden_dim), jnp.float32)
    b2 = jnp.zeros((1, hidden_dim), jnp.float32)
    b3 = jnp.zeros((1, out_dim), jnp.float32)
    return [w1, b1, w2, b2, w3, b3]


def _ref_mlp(x, p):
    w1, b1, w2, b2, w3, b3 = p
    h = jnp.maximum(x @ w1 + b1, 0.0)
    h = jnp.maximum(h @ w2 + b2, 0.0)
    return h @ w3 + b3


if __name__ == "__main__":
    root = jax.random.PRNGKey(0)
    keys = jax.random.split(root, 4)

    def check(obs_dim, action_dim, hidden_dim, B, key, tag):
        in_dim = obs_dim + action_dim
        kq1, kq2, ko, ka = jax.random.split(key, 4)
        q1_p = init_mlp_params(kq1, in_dim, hidden_dim, 1)
        q2_p = init_mlp_params(kq2, in_dim, hidden_dim, 1)
        body, boffs, head, hoffs = pack_double_q_params(q1_p, q2_p, hidden_dim)
        obs = jax.random.normal(ko, (B, obs_dim), jnp.float32)
        act = jax.random.normal(ka, (B, action_dim), jnp.float32)
        q1, q2 = double_q_critic(obs, act, body, boffs, head, hoffs,
                                 hidden_dim=hidden_dim)
        jax.block_until_ready((q1, q2))
        x = jnp.concatenate([obs, act], axis=-1)
        r1, r2 = _ref_mlp(x, q1_p), _ref_mlp(x, q2_p)
        assert q1.shape == (B, 1) and q2.shape == (B, 1)
        assert jnp.allclose(q1, r1, atol=1e-3, rtol=1e-3), f"q1 mismatch ({tag})"
        assert jnp.allclose(q2, r2, atol=1e-3, rtol=1e-3), f"q2 mismatch ({tag})"

    # Small batch, small hidden: gridless path, fused block-diagonal W2.
    check(17, 7, 32, 8, keys[0], "gridless/fused")
    # Large ragged batch: cdiv grid + tail padding, batch-parallel (megacore).
    check(17, 7, 32, 4500, keys[1], "grid/fused")
    # 128-aligned hidden: split per-critic layer-2/3 path, both code paths.
    check(17, 7, 256, 16, keys[2], "gridless/split")
    check(17, 7, 256, 4096, keys[3], "grid/split")

    print("KERNEL_OK")
</pallas_src>

<mosaic_0001>
module attributes {stable_mosaic.version = 11 : i64} {
  func.func @kernel(%arg0: memref<8x24xf32, #tpu.memory_space<vmem>>, %arg1: memref<104x64xf32, #tpu.memory_space<vmem>>, %arg2: memref<72x128xf32, #tpu.memory_space<vmem>>, %arg3: memref<8x128xf32, #tpu.memory_space<vmem>>) attributes {dimension_semantics = [], scalar_prefetch = 0 : i64, scratch_operands = 0 : i64, tpu.core_type = #tpu.core_type<tc>} {
    %c0 = arith.constant 0 : index
    %c0_0 = arith.constant 0 : index
    %0 = vector.load %arg0[%c0, %c0_0] : memref<8x24xf32, #tpu.memory_space<vmem>>, vector<8x24xf32>
    %c0_1 = arith.constant 0 : index
    %c0_2 = arith.constant 0 : index
    %1 = vector.load %arg1[%c0_1, %c0_2] : memref<104x64xf32, #tpu.memory_space<vmem>>, vector<24x64xf32>
    %c24 = arith.constant 24 : index
    %c0_3 = arith.constant 0 : index
    %2 = vector.load %arg1[%c24, %c0_3] : memref<104x64xf32, #tpu.memory_space<vmem>>, vector<1x64xf32>
    %c96 = arith.constant 96 : index
    %c0_4 = arith.constant 0 : index
    %3 = vector.load %arg1[%c96, %c0_4] : memref<104x64xf32, #tpu.memory_space<vmem>>, vector<1x64xf32>
    %c64 = arith.constant 64 : index
    %c0_5 = arith.constant 0 : index
    %4 = vector.load %arg2[%c64, %c0_5] : memref<72x128xf32, #tpu.memory_space<vmem>>, vector<1x128xf32>
    %cst = arith.constant dense<0.000000e+00> : vector<8x64xf32>
    %5 = tpu.matmul %0, %1, %cst {dimension_numbers = #tpu.dot_dimension_numbers<[1], [0], [0], [1], [0, 0, 1, 1], [], []>} : vector<8x24xf32>, vector<24x64xf32>, vector<8x64xf32> -> vector<8x64xf32>
    %6 = vector.broadcast %2 : vector<1x64xf32> to vector<8x64xf32>
    %7 = arith.addf %5, %6 : vector<8x64xf32>
    %cst_6 = arith.constant 0.000000e+00 : f32
    %8 = vector.broadcast %cst_6 : f32 to vector<8x64xf32>
    %9 = arith.maximumf %7, %8 : vector<8x64xf32>
    %c32 = arith.constant 32 : index
    %c0_7 = arith.constant 0 : index
    %10 = vector.load %arg1[%c32, %c0_7] : memref<104x64xf32, #tpu.memory_space<vmem>>, vector<64x64xf32>
    %c0_8 = arith.constant 0 : index
    %c0_9 = arith.constant 0 : index
    %11 = vector.load %arg2[%c0_8, %c0_9] : memref<72x128xf32, #tpu.memory_space<vmem>>, vector<64x128xf32>
    %cst_10 = arith.constant dense<0.000000e+00> : vector<8x64xf32>
    %12 = tpu.matmul %9, %10, %cst_10 {dimension_numbers = #tpu.dot_dimension_numbers<[1], [0], [0], [1], [0, 0, 1, 1], [], []>} : vector<8x64xf32>, vector<64x64xf32>, vector<8x64xf32> -> vector<8x64xf32>
    %13 = vector.broadcast %3 : vector<1x64xf32> to vector<8x64xf32>
    %14 = arith.addf %12, %13 : vector<8x64xf32>
    %cst_11 = arith.constant 0.000000e+00 : f32
    %15 = vector.broadcast %cst_11 : f32 to vector<8x64xf32>
    %16 = arith.maximumf %14, %15 : vector<8x64xf32>
    %cst_12 = arith.constant dense<0.000000e+00> : vector<8x128xf32>
    %17 = tpu.matmul %16, %11, %cst_12 {dimension_numbers = #tpu.dot_dimension_numbers<[1], [0], [0], [1], [0, 0, 1, 1], [], []>} : vector<8x64xf32>, vector<64x128xf32>, vector<8x128xf32> -> vector<8x128xf32>
    %18 = vector.broadcast %4 : vector<1x128xf32> to vector<8x128xf32>
    %19 = arith.addf %17, %18 : vector<8x128xf32>
    %c0_13 = arith.constant 0 : index
    %c0_14 = arith.constant 0 : index
    %20 = vector.load %arg3[%c0_13, %c0_14] : memref<8x128xf32, #tpu.memory_space<vmem>>, vector<8x128xf32>
    tpu.vector_store %arg3[%c0_13, %c0_14], %19 {strides = array<i32>} : memref<8x128xf32, #tpu.memory_space<vmem>>, vector<8x128xf32>,
    return
  }
}

</mosaic_0001>

<llo_original>
// kernel: tpu_custom_call.1
$region0: #{tpu_custom_call.1}
  #allocation0 [shape = 'u32[]', space=smem, size = 0x4, offset = 0x4, fixed_abs, tag = 'smem constant byte address 0x4 - core index']
  #allocation1 [shape = 'u32[144,128]{1,0:T(1,128)}', space=vmem, size = 0x12000, scoped, tag = 'internal scratch']
  %s0 = inlined_call_operand.vmem [shape: f32[8,24], index: 0, kind: input, shape index: {}]
  %s1 = inlined_call_operand.vmem [shape: f32[104,64], index: 1, kind: input, shape index: {}]
  %s2 = inlined_call_operand.vmem [shape: f32[72,128], index: 2, kind: input, shape index: {}]
  %s3 = inlined_call_operand.hbm [shape: f32[8,128], index: 3, kind: output, shape index: {}]
  %s4 = sld [smem:[#allocation0]]
  $region22: #{tpu_custom_call.1} parent=0
    _
  %s6 = ssub.s32 1, %s4
  %s7 = scalar_select 0, %s6, %s4
  $region1: #{tpu_custom_call.1} parent=0
    #allocation2 [shape = 'u8[4096]{0}', space=vmem, size = 0x1000, scoped, tag = 'output window, operand 0, single buffered']
    #allocation3 [shape = 's32[1]{0}', space=sflag, size = 0x4, scoped, tag = 'scoped memory for tpu_custom_call.1']
    %8 = vsyncpa [#allocation3], 0
    // Predicated region
    $region2: #{tpu_custom_call.1} parent=1 // pred_check
      _
    $region3: #{tpu_custom_call.1} parent=1 // pred_check_branch
      %10 = sbr.rel (0) target = $region5
    $region4: #{tpu_custom_call.1} parent=1 // pred_region
      _
    $region5: #{tpu_custom_call.1} parent=1 // pred_fallthru
      _
    // Predicated region
    $region6: #{tpu_custom_call.1} parent=1 // pred_check
      _
    $region7: #{tpu_custom_call.1} parent=1 // pred_check_branch
      %12 = sbr.rel (0) target = $region9
    $region8: #{tpu_custom_call.1} parent=1 // pred_region
      _
    $region9: #{tpu_custom_call.1} parent=1 // pred_fallthru
      _
    // Predicated region
    $region10: #{tpu_custom_call.1} parent=1 // pred_check
      _
    $region11: #{tpu_custom_call.1} parent=1 // pred_check_branch
      %14 = sbr.rel (0) target = $region13
    $region12: #{tpu_custom_call.1} parent=1 // pred_region
      _
    $region13: #{tpu_custom_call.1} parent=1 // pred_fallthru
      _
    %v15 = vld [vmem:[%s0] sm:$0xff]
    %v16 = vld [vmem:[%s1] sm:$0xff]
    %v17 = vld [vmem:[%s1 + $0x8] sm:$0xff]
    %v18 = vld [vmem:[%s1 + $0x10] sm:$0xff]
    %v19 = vld [vmem:[%s1 + $0x18] sm:$0x1]
    %v20 = vld [vmem:[%s1 + $0x60] sm:$0x1]
    %v21 = vld [vmem:[%s2 + $0x40] sm:$0x1]
    %v22 = vlaneseq
    %v23 = vshrl.u32 %v22, 7
    %v24 = vsub.s32 0, %v23
    %v25 = vrot.slane %v19, %v24
    %vm26 = vcmask 195584
    %v28 = vsel %vm26, %v15, 0
    %30 = vmatprep.subr.mxu0 0.0
    %31 = vmatpush1.msra.mxu0 0.0
    %32 = vmatprep.subr.mxu0 0.0
    %33 = vmatpush1.msra.mxu0 0.0
    %34 = vmatprep.subr.mxu0 0.0
    %35 = vmatpush1.msra.mxu0 0.0
    %36 = vmatprep.subr.mxu0 0.0
    %37 = vmatpush1.msra.mxu0 0.0
    %38 = vmatprep.subr.mxu0 0.0
    %39 = vmatpush1.msra.mxu0 0.0
    %40 = vmatprep.subr.mxu0 0.0
    %41 = vmatpush1.msra.mxu0 0.0
    %42 = vmatprep.subr.mxu0 0.0
    %43 = vmatpush1.msra.mxu0 0.0
    %44 = vmatprep.subr.mxu0 0.0
    %45 = vmatpush1.msra.mxu0 0.0
    %46 = vmatprep.subr.mxu0 0.0
    %47 = vmatpush1.msra.mxu0 0.0
    %48 = vmatprep.subr.mxu0 0.0
    %49 = vmatpush1.msra.mxu0 0.0
    %50 = vmatprep.subr.mxu0 0.0
    %51 = vmatpush1.msra.mxu0 0.0
    %52 = vmatprep.subr.mxu0 0.0
    %53 = vmatpush1.msra.mxu0 0.0
    %54 = vmatprep.subr.mxu0 0.0
    %55 = vmatpush1.msra.mxu0 0.0
    %56 = vmatprep.subr.mxu0 0.0
    %57 = vmatpush1.msra.mxu0 %v18
    %58 = vmatprep.subr.mxu0 0.0
    %59 = vmatpush1.msra.mxu0 %v17
    %60 = vmatprep.subr.mxu0 0.0
    %61 = vmatpush1.msra.mxu0 %v16
    %62 = vmatprep.subr.mxu0 0.0
    %63 = vmatpush2.msra.mxu0 0.0
    %64 = vmatprep.subr.mxu0 0.0
    %65 = vmatpush2.msra.mxu0 0.0
    %66 = vmatprep.subr.mxu0 0.0
    %67 = vmatpush2.msra.mxu0 0.0
    %68 = vmatprep.subr.mxu0 0.0
    %69 = vmatpush2.msra.mxu0 0.0
    %70 = vmatprep.subr.mxu0 0.0
    %71 = vmatpush2.msra.mxu0 0.0
    %72 = vmatprep.subr.mxu0 0.0
    %73 = vmatpush2.msra.mxu0 0.0
    %74 = vmatprep.subr.mxu0 0.0
    %75 = vmatpush2.msra.mxu0 0.0
    %76 = vmatprep.subr.mxu0 0.0
    %77 = vmatpush2.msra.mxu0 0.0
    %78 = vmatprep.subr.mxu0 0.0
    %79 = vmatpush2.msra.mxu0 0.0
    %80 = vmatprep.subr.mxu0 0.0
    %81 = vmatpush2.msra.mxu0 0.0
    %82 = vmatprep.subr.mxu0 0.0
    %83 = vmatpush2.msra.mxu0 0.0
    %84 = vmatprep.subr.mxu0 0.0
    %85 = vmatpush2.msra.mxu0 0.0
    %86 = vmatprep.subr.mxu0 0.0
    %87 = vmatpush2.msra.mxu0 0.0
    %88 = vmatprep.subr.mxu0 0.0
    %89 = vmatpush2.msra.mxu0 0.0
    %90 = vmatprep.subr.mxu0 0.0
    %91 = vmatpush2.msra.mxu0 0.0
    %92 = vmatprep.subr.mxu0 0.0
    %93 = vmatpush2.msra.mxu0 0.0
    %94 = vmatprep.mubr.f32.mxu0 0.0
    %95 = vmatmul.mubr.f32.gmra.mxu0 %v28
    %v96 = vpop.f32.mrf.mxu0
    %v97 = vadd.f32 %v25, %v96
    %v98 = vpop.f32.mrf.mxu0
    %99 = vdwg.mxu0
    %v100 = vmax.f32 %v97, 0.0
    %v101 = vld [vmem:[%s1 + $0x20] sm:$0xff]
    %v102 = vld [vmem:[%s1 + $0x28] sm:$0xff]
    %v103 = vld [vmem:[%s1 + $0x30] sm:$0xff]
    %v104 = vld [vmem:[%s1 + $0x38] sm:$0xff]
    %v105 = vld [vmem:[%s1 + $0x40] sm:$0xff]
    %v106 = vld [vmem:[%s1 + $0x48] sm:$0xff]
    %v107 = vld [vmem:[%s1 + $0x50] sm:$0xff]
    %v108 = vld [vmem:[%s1 + $0x58] sm:$0xff]
    %v109 = vld [vmem:[%s2] sm:$0xff]
    %v110 = vld [vmem:[%s2 + $0x8] sm:$0xff]
    %v111 = vld [vmem:[%s2 + $0x10] sm:$0xff]
    %v112 = vld [vmem:[%s2 + $0x18] sm:$0xff]
    %v113 = vld [vmem:[%s2 + $0x20] sm:$0xff]
    %v114 = vld [vmem:[%s2 + $0x28] sm:$0xff]
    %v115 = vld [vmem:[%s2 + $0x30] sm:$0xff]
    %v116 = vld [vmem:[%s2 + $0x38] sm:$0xff]
    %v117 = vlaneseq
    %v118 = vshrl.u32 %v117, 7
    %v119 = vsub.s32 0, %v118
    %v120 = vrot.slane %v20, %v119
    %vm121 = vcmask 523264
    %v123 = vsel %vm121, %v100, 0
    %125 = vmatprep.subr.mxu0 0.0
    %126 = vmatpush1.msra.mxu0 0.0
    %127 = vmatprep.subr.mxu0 0.0
    %128 = vmatpush1.msra.mxu0 0.0
    %129 = vmatprep.subr.mxu0 0.0
    %130 = vmatpush1.msra.mxu0 0.0
    %131 = vmatprep.subr.mxu0 0.0
    %132 = vmatpush1.msra.mxu0 0.0
    %133 = vmatprep.subr.mxu0 0.0
    %134 = vmatpush1.msra.mxu0 0.0
    %135 = vmatprep.subr.mxu0 0.0
    %136 = vmatpush1.msra.mxu0 0.0
    %137 = vmatprep.subr.mxu0 0.0
    %138 = vmatpush1.msra.mxu0 0.0
    %139 = vmatprep.subr.mxu0 0.0
    %140 = vmatpush1.msra.mxu0 0.0
    %141 = vmatprep.subr.mxu0 0.0
    %142 = vmatpush1.msra.mxu0 %v108
    %143 = vmatprep.subr.mxu0 0.0
    %144 = vmatpush1.msra.mxu0 %v107
    %145 = vmatprep.subr.mxu0 0.0
    %146 = vmatpush1.msra.mxu0 %v106
    %147 = vmatprep.subr.mxu0 0.0
    %148 = vmatpush1.msra.mxu0 %v105
    %149 = vmatprep.subr.mxu0 0.0
    %150 = vmatpush1.msra.mxu0 %v104
    %151 = vmatprep.subr.mxu0 0.0
    %152 = vmatpush1.msra.mxu0 %v103
    %153 = vmatprep.subr.mxu0 0.0
    %154 = vmatpush1.msra.mxu0 %v102
    %155 = vmatprep.subr.mxu0 0.0
    %156 = vmatpush1.msra.mxu0 %v101
    %157 = vmatprep.subr.mxu0 0.0
    %158 = vmatpush2.msra.mxu0 0.0
    %159 = vmatprep.subr.mxu0 0.0
    %160 = vmatpush2.msra.mxu0 0.0
    %161 = vmatprep.subr.mxu0 0.0
    %162 = vmatpush2.msra.mxu0 0.0
    %163 = vmatprep.subr.mxu0 0.0
    %164 = vmatpush2.msra.mxu0 0.0
    %165 = vmatprep.subr.mxu0 0.0
    %166 = vmatpush2.msra.mxu0 0.0
    %167 = vmatprep.subr.mxu0 0.0
    %168 = vmatpush2.msra.mxu0 0.0
    %169 = vmatprep.subr.mxu0 0.0
    %170 = vmatpush2.msra.mxu0 0.0
    %171 = vmatprep.subr.mxu0 0.0
    %172 = vmatpush2.msra.mxu0 0.0
    %173 = vmatprep.subr.mxu0 0.0
    %174 = vmatpush2.msra.mxu0 0.0
    %175 = vmatprep.subr.mxu0 0.0
    %176 = vmatpush2.msra.mxu0 0.0
    %177 = vmatprep.subr.mxu0 0.0
    %178 = vmatpush2.msra.mxu0 0.0
    %179 = vmatprep.subr.mxu0 0.0
    %180 = vmatpush2.msra.mxu0 0.0
    %181 = vmatprep.subr.mxu0 0.0
    %182 = vmatpush2.msra.mxu0 0.0
    %183 = vmatprep.subr.mxu0 0.0
    %184 = vmatpush2.msra.mxu0 0.0
    %185 = vmatprep.subr.mxu0 0.0
    %186 = vmatpush2.msra.mxu0 0.0
    %187 = vmatprep.subr.mxu0 0.0
    %188 = vmatpush2.msra.mxu0 0.0
    %189 = vmatprep.mubr.f32.mxu0 0.0
    %190 = vmatmul.mubr.f32.gmra.mxu0 %v123
    %v191 = vpop.f32.mrf.mxu0
    %v192 = vadd.f32 %v120, %v191
    %v193 = vpop.f32.mrf.mxu0
    %194 = vdwg.mxu0
    %v195 = vmax.f32 %v192, 0.0
    %v196 = vlaneseq
    %v197 = vshrl.u32 %v196, 7
    %v198 = vsub.s32 0, %v197
    %v199 = vrot.slane %v21, %v198
    %v201 = vsel %vm121, %v195, 0
    %203 = vmatprep.subr.mxu0 0.0
    %204 = vmatpush1.msra.mxu0 0.0
    %205 = vmatprep.subr.mxu0 0.0
    %206 = vmatpush1.msra.mxu0 0.0
    %207 = vmatprep.subr.mxu0 0.0
    %208 = vmatpush1.msra.mxu0 0.0
    %209 = vmatprep.subr.mxu0 0.0
    %210 = vmatpush1.msra.mxu0 0.0
    %211 = vmatprep.subr.mxu0 0.0
    %212 = vmatpush1.msra.mxu0 0.0
    %213 = vmatprep.subr.mxu0 0.0
    %214 = vmatpush1.msra.mxu0 0.0
    %215 = vmatprep.subr.mxu0 0.0
    %216 = vmatpush1.msra.mxu0 0.0
    %217 = vmatprep.subr.mxu0 0.0
    %218 = vmatpush1.msra.mxu0 0.0
    %219 = vmatprep.subr.mxu0 0.0
    %220 = vmatpush1.msra.mxu0 %v116
    %221 = vmatprep.subr.mxu0 0.0
    %222 = vmatpush1.msra.mxu0 %v115
    %223 = vmatprep.subr.mxu0 0.0
    %224 = vmatpush1.msra.mxu0 %v114
    %225 = vmatprep.subr.mxu0 0.0
    %226 = vmatpush1.msra.mxu0 %v113
    %227 = vmatprep.subr.mxu0 0.0
    %228 = vmatpush1.msra.mxu0 %v112
    %229 = vmatprep.subr.mxu0 0.0
    %230 = vmatpush1.msra.mxu0 %v111
    %231 = vmatprep.subr.mxu0 0.0
    %232 = vmatpush1.msra.mxu0 %v110
    %233 = vmatprep.subr.mxu0 0.0
    %234 = vmatpush1.msra.mxu0 %v109
    %235 = vmatprep.subr.mxu0 0.0
    %236 = vmatpush2.msra.mxu0 0.0
    %237 = vmatprep.subr.mxu0 0.0
    %238 = vmatpush2.msra.mxu0 0.0
    %239 = vmatprep.subr.mxu0 0.0
    %240 = vmatpush2.msra.mxu0 0.0
    %241 = vmatprep.subr.mxu0 0.0
    %242 = vmatpush2.msra.mxu0 0.0
    %243 = vmatprep.subr.mxu0 0.0
    %244 = vmatpush2.msra.mxu0 0.0
    %245 = vmatprep.subr.mxu0 0.0
    %246 = vmatpush2.msra.mxu0 0.0
    %247 = vmatprep.subr.mxu0 0.0
    %248 = vmatpush2.msra.mxu0 0.0
    %249 = vmatprep.subr.mxu0 0.0
    %250 = vmatpush2.msra.mxu0 0.0
    %251 = vmatprep.subr.mxu0 0.0
    %252 = vmatpush2.msra.mxu0 0.0
    %253 = vmatprep.subr.mxu0 0.0
    %254 = vmatpush2.msra.mxu0 0.0
    %255 = vmatprep.subr.mxu0 0.0
    %256 = vmatpush2.msra.mxu0 0.0
    %257 = vmatprep.subr.mxu0 0.0
    %258 = vmatpush2.msra.mxu0 0.0
    %259 = vmatprep.subr.mxu0 0.0
    %260 = vmatpush2.msra.mxu0 0.0
    %261 = vmatprep.subr.mxu0 0.0
    %262 = vmatpush2.msra.mxu0 0.0
    %263 = vmatprep.subr.mxu0 0.0
    %264 = vmatpush2.msra.mxu0 0.0
    %265 = vmatprep.subr.mxu0 0.0
    %266 = vmatpush2.msra.mxu0 0.0
    %267 = vmatprep.mubr.f32.mxu0 0.0
    %268 = vmatmul.mubr.f32.gmra.mxu0 %v201
    %v269 = vpop.f32.mrf.mxu0
    %v270 = vadd.f32 %v199, %v269
    %v271 = vpop.f32.mrf.mxu0
    %272 = vdwg.mxu0
    %273 = vst [vmem:[#allocation2] sm:$0xff] %v270
    // Predicated region
    $region14: #{tpu_custom_call.1} parent=1 // pred_check
      _
    $region15: #{tpu_custom_call.1} parent=1 // pred_check_branch
      %275 = sbr.rel (0) target = $region17
    $region16: #{tpu_custom_call.1} parent=1 // pred_region
      %s277 = ssub.s32 128, 128
      %278 = vsyncadd [#allocation3], %s277
      %s280 = sshll.u32 [#allocation2], 4
      %s281 = int_to_ptr.vmem [resolvable:$true] %s280
      %283 = dma.vmem_to_hbm [thread:$0]  %s281, 128, %s3, [#allocation3]
    $region17: #{tpu_custom_call.1} parent=1 // pred_fallthru
      _
    // Predicated region
    $region18: #{tpu_custom_call.1} parent=1 // pred_check
      _
    $region19: #{tpu_custom_call.1} parent=1 // pred_check_branch
      %285 = sbr.rel (0) target = $region21
    $region20: #{tpu_custom_call.1} parent=1 // pred_region
      %286 = dma.done [#allocation3], 128
    $region21: #{tpu_custom_call.1} parent=1 // pred_fallthru
      _
    %287 = vsyncpa [#allocation3], 1

</llo_original>
